<compile_context>
chip_gen: v6e
topology: v6e:2x2x1
jax: 0.10.0
libtpu: 0.0.40
codegen_flags: <defaults>
</compile_context>

<pallas_src>
import functools

import jax
import jax.numpy as jnp
from jax.experimental import pallas as pl
from jax.experimental.pallas import tpu as pltpu


def _round_up(a, b):
    return (a + b - 1) // b * b


# ----------------------------- Pallas kernels ------------------------------

def _neg_l1(x_ref, w_ref, f):
    """(8, bp) block of -sum_k |x[k] - w[f, k]| for one filter f.

    x_ref: (K_pad, 8, bp), w_ref: (F, K_pad//8, 8).  The accumulator is a
    small register block; k runs in a fori_loop over groups of 8 with the
    8 sub-steps statically unrolled (full-width vlds, no x broadcast).
    """
    K_pad = x_ref.shape[0]
    G = K_pad // 8
    blk = (x_ref.shape[1], x_ref.shape[2])

    def g_body(g, acc):
        k0 = pl.multiple_of(g * 8, 8)
        for dk in range(8):                                  # static unroll
            x_b = x_ref[k0 + dk]                             # (8, bp) plain load
            w11 = w_ref[f, pl.ds(g, 1), pl.ds(dk, 1)]        # (1, 1) -> replicated
            acc = acc - jnp.abs(x_b - w11)
        return acc

    return jax.lax.fori_loop(0, G, g_body, jnp.zeros(blk, jnp.float32))
    # TODO(synk): keep the weights in SMEM (scalar operand splat) when
    # F*K_pad*4 fits, shaving the per-(f,k) broadcast off the vector units.


def _adder_kernel(x_ref, w_ref, o_ref, *, relu=True):
    # o[f, s, l] = (relu)( -sum_k |x[k, s, l] - w[f, k]| )
    def f_body(f, carry):
        acc = _neg_l1(x_ref, w_ref, f)
        out = jnp.maximum(acc, 0.0) if relu else acc
        o_ref[f] = out.astype(o_ref.dtype)
        return carry

    jax.lax.fori_loop(0, o_ref.shape[0], f_body, 0)


def _adder_res_kernel(x_ref, w_ref, id_ref, o_ref, *, scale):
    # o[f] = scale * relu( -sum_k |x[k] - w[f, k]| ) + identity[f]
    def f_body(f, carry):
        acc = _neg_l1(x_ref, w_ref, f)
        o_ref[f] = (scale * jnp.maximum(acc, 0.0)
                    + id_ref[f].astype(jnp.float32)).astype(o_ref.dtype)
        return carry

    jax.lax.fori_loop(0, o_ref.shape[0], f_body, 0)


# --------------------------- tiling / VMEM plan -----------------------------

def _plan(K_pad, F, extra_rows, P):
    """Pick the lane tile bp (pixels per grid step = 8*bp) and the VMEM limit."""
    try:
        cap = int(pltpu.get_tpu_info().vmem_capacity_bytes)
    except Exception:
        cap = 64 << 20                      # v7x per-TensorCore VMEM (smallest)
    budget = int(0.60 * cap)
    rows = 2 * K_pad + 2 * F + 2 * extra_rows      # double-buffered streamed rows
    # keep >= 2 grid steps when the problem allows (v7x has 2 TensorCores)
    p_cap = max(1024, _round_up(P, 1024) // 2)

    bp = 128
    for cand in (2048, 1024, 512, 256, 128):
        est = 4 * (rows * 8 * cand + F * K_pad)
        if est <= budget and 8 * cand <= p_cap:
            bp = cand
            break
    est = 4 * (rows * 8 * bp + F * K_pad)
    vmem_limit = int(min(int(0.85 * cap), max(32 << 20, 2 * est)))
    return bp, vmem_limit


def _adder_call(kernel, x3, w3, extras, bp, F, vmem_limit):
    """Run an adder kernel over the pixel axis in (8, bp) lane-dense tiles."""
    K_pad, _, Pc = x3.shape
    G = K_pad // 8
    assert Pc % bp == 0 and bp % 128 == 0

    in_specs = [
        pl.BlockSpec((K_pad, 8, bp), lambda i: (0, 0, i)),   # streamed x tile
        pl.BlockSpec((F, G, 8), lambda i: (0, 0, 0)),        # constant weights
    ]
    args = [x3, w3]
    for extra in extras:                                     # e.g. identity
        in_specs.append(pl.BlockSpec((extra.shape[0], 8, bp), lambda i: (0, 0, i)))
        args.append(extra)

    return pl.pallas_call(
        kernel,
        out_shape=jax.ShapeDtypeStruct((F, 8, Pc), jnp.float32),
        grid_spec=pltpu.PrefetchScalarGridSpec(
            num_scalar_prefetch=0,
            grid=(Pc // bp,),
            in_specs=in_specs,
            out_specs=pl.BlockSpec((F, 8, bp), lambda i: (0, 0, i)),
        ),
        compiler_params=pltpu.CompilerParams(
            dimension_semantics=("parallel",),
            vmem_limit_bytes=vmem_limit),
    )(*args)


# ------------------------------- JAX glue ----------------------------------

def _im2col_T(x_cmaj):
    """(C, N, H, W) -> (C*9, N*H*W); 3x3 patches, padding=1, stride=1,
    K ordered (c, kh, kw) to match PyTorch W.view(F, -1)."""
    C, N, H, W = x_cmaj.shape
    xp = jnp.pad(x_cmaj, ((0, 0), (0, 0), (1, 1), (1, 1)))
    shifts = [xp[:, :, kh:kh + H, kw:kw + W]
              for kh in range(3) for kw in range(3)]          # 9 x (C, N, H, W)
    p = jnp.stack(shifts, axis=1)                             # (C, 9, N, H, W)
    return p.reshape(C * 9, N * H * W)
    # TODO(synk): build the 9 shifted taps inside the kernel from a halo'd
    # channel-major spatial block (removes the 9x-expanded HBM stream, the
    # dominant DMA cost at production channel counts, esp. on v5e).


def _to_blocks(a2d, rows_pad, p_pad):
    """Zero-pad (rows, P) to (rows_pad, p_pad) and view as (rows_pad, 8, p_pad//8)."""
    rows, p = a2d.shape
    a2d = jnp.pad(a2d, ((0, rows_pad - rows), (0, p_pad - p)))
    return a2d.reshape(rows_pad, 8, p_pad // 8)


def _prep_w(w, K_pad):
    F = w.shape[0]
    wf = w.reshape(F, -1).astype(jnp.float32)
    wf = jnp.pad(wf, ((0, 0), (0, K_pad - wf.shape[1])))
    return wf.reshape(F, K_pad // 8, 8)


def adder2d_forward(x, w, relu=False):
    """Standalone adder2d (3x3, stride 1, pad 1), NCHW in / NCHW out."""
    N, C, H, W = x.shape
    F = w.shape[0]
    P = N * H * W
    K_pad = _round_up(C * 9, 8)
    bp, vmem_limit = _plan(K_pad, F, 0, P)
    P_pad = _round_up(P, 8 * bp)

    x3 = _to_blocks(_im2col_T(x.transpose(1, 0, 2, 3).astype(jnp.float32)),
                    K_pad, P_pad)
    out3 = _adder_call(functools.partial(_adder_kernel, relu=relu),
                       x3, _prep_w(w, K_pad), [], bp, F, vmem_limit)
    out = out3.reshape(F, P_pad)[:, :P]
    return out.reshape(F, N, H, W).transpose(1, 0, 2, 3)


def add_resnet_block_forward(x, w1, w2, scale=0.1):
    """x: (N, C, H, W); w1: (planes, C, 3, 3); w2: (planes, planes, 3, 3)."""
    N, C, H, W = x.shape
    F1, F2 = w1.shape[0], w2.shape[0]
    assert F2 == C, "residual add requires planes == inplanes"
    P = N * H * W

    x_cmaj = x.transpose(1, 0, 2, 3).astype(jnp.float32)      # (C, N, H, W)
    idT = x_cmaj.reshape(C, P)                                # identity, (C, P)

    # ---- layer 1: relu(adder1(x)) ----
    K1p = _round_up(C * 9, 8)
    bp1, vmem1 = _plan(K1p, F1, 0, P)
    P1 = _round_up(P, 8 * bp1)
    x13 = _to_blocks(_im2col_T(x_cmaj), K1p, P1)
    out1_3 = _adder_call(functools.partial(_adder_kernel, relu=True),
                         x13, _prep_w(w1, K1p), [], bp1, F1, vmem1)
    out1 = out1_3.reshape(F1, P1)[:, :P]                      # (F1, P) channel-major

    # ---- layer 2: scale * relu(adder2(.)) + x  (fused epilogue) ----
    K2p = _round_up(F1 * 9, 8)
    bp2, vmem2 = _plan(K2p, F2, C, P)
    P2 = _round_up(P, 8 * bp2)
    x23 = _to_blocks(_im2col_T(out1.reshape(F1, N, H, W)), K2p, P2)
    id3 = _to_blocks(idT, C, P2)
    out2_3 = _adder_call(functools.partial(_adder_res_kernel, scale=scale),
                         x23, _prep_w(w2, K2p), [id3], bp2, F2, vmem2)
    out2 = out2_3.reshape(F2, P2)[:, :P]
    return out2.reshape(F2, N, H, W).transpose(1, 0, 2, 3)
    # TODO(synk): fuse both adder layers into one pallas_call over spatial
    # tiles with a 1-px halo (intermediate stays in VMEM, no HBM round trip),
    # and stream x/out1 as bf16 with f32 accumulation on v6e/v7x only
    # (v5e has no bf16 VALU, so keep f32 compute there).


# ---------------------------- pure-JAX reference ----------------------------

def _adder_ref(x, w):
    """AdderNet adder2d, kernel 3, stride 1, padding 1 (pure JAX, NCHW)."""
    N, C, H, W = x.shape
    F = w.shape[0]
    xp = jnp.pad(x, ((0, 0), (0, 0), (1, 1), (1, 1)))
    patches = jnp.stack([xp[:, :, kh:kh + H, kw:kw + W]
                         for kh in range(3) for kw in range(3)],
                        axis=2)                                  # (N, C, 9, H, W)
    wf = w.reshape(F, C, 9)
    d = jnp.abs(patches[:, None] - wf[None, :, :, :, None, None])  # (N,F,C,9,H,W)
    return -d.sum(axis=(2, 3))


def _block_ref(x, w1, w2, scale):
    out = jnp.maximum(_adder_ref(x, w1), 0.0)
    out = jnp.maximum(_adder_ref(out, w2), 0.0)
    return scale * out + x


# ---------------------------------- main ------------------------------------

if __name__ == "__main__":
    inplanes = planes = 4
    N, H, W = 2, 16, 16
    scale = 0.1

    key = jax.random.PRNGKey(0)
    kx, kw1, kw2 = jax.random.split(key, 3)
    x = jax.random.normal(kx, (N, inplanes, H, W), dtype=jnp.float32)
    # adder2d weights: nn.init.normal_ on (out_ch, in_ch, k, k)
    w1 = jax.random.normal(kw1, (planes, inplanes, 3, 3), dtype=jnp.float32)
    w2 = jax.random.normal(kw2, (planes, planes, 3, 3), dtype=jnp.float32)

    # Check the raw adder arithmetic (pre-relu, values are non-trivial).
    raw = jax.block_until_ready(adder2d_forward(x, w1, relu=False))
    raw_ref = _adder_ref(x, w1)
    assert jnp.allclose(raw, raw_ref, atol=1e-3, rtol=1e-4), "adder mismatch"

    # Full residual block.
    out = add_resnet_block_forward(x, w1, w2, scale=scale)
    out = jax.block_until_ready(out)

    ref = _block_ref(x, w1, w2, scale)
    assert out.shape == (N, planes, H, W)
    assert jnp.allclose(out, ref, atol=1e-4, rtol=1e-4), "mismatch vs reference"

    print("KERNEL_OK")
</pallas_src>

<mosaic_0001>
module attributes {stable_mosaic.version = 11 : i64} {
  func.func @_adder_kernel(%arg0: i32, %arg1: memref<40x8x128xf32, #tpu.memory_space<vmem>>, %arg2: memref<4x5x8xf32, #tpu.memory_space<vmem>>, %arg3: memref<4x8x128xf32, #tpu.memory_space<vmem>>) attributes {dimension_semantics = [#tpu.dimension_semantics<parallel>], iteration_bounds = array<i64: 1>, scalar_prefetch = 0 : i64, scratch_operands = 0 : i64, tpu.core_type = #tpu.core_type<tc>, window_params = [{transform_indices = @transform_0, window_bounds = array<i64: 40, 8, 128>}, {pipeline_mode = #tpu.pipeline_mode<synchronous>, transform_indices = @transform_1, window_bounds = array<i64: 4, 5, 8>}, {transform_indices = @transform_2, window_bounds = array<i64: 4, 8, 128>}]} {
    %c0_i32 = arith.constant 0 : i32
    %c4_i32 = arith.constant 4 : i32
    %0 = arith.addi %c0_i32, %c4_i32 : i32
    %c1_i32 = arith.constant 1 : i32
    scf.for %arg4 = %c0_i32 to %0 step %c1_i32  : i32 {
      %cst = arith.constant 0.000000e+00 : f32
      %1 = vector.broadcast %cst : f32 to vector<8x128xf32>
      %c0_i32_1 = arith.constant 0 : i32
      %c5_i32 = arith.constant 5 : i32
      %2 = arith.addi %c0_i32_1, %c5_i32 : i32
      %c1_i32_2 = arith.constant 1 : i32
      %3 = scf.for %arg5 = %c0_i32_1 to %2 step %c1_i32_2 iter_args(%arg6 = %1) -> (vector<8x128xf32>)  : i32 {
        %c8_i32 = arith.constant 8 : i32
        %8 = arith.muli %arg5, %c8_i32 : i32
        %9 = tpu.assume_multiple %8, 8 : i32
        %c0_i32_5 = arith.constant 0 : i32
        %10 = arith.addi %9, %c0_i32_5 : i32
        %11 = arith.index_cast %10 : i32 to index
        %c0_6 = arith.constant 0 : index
        %c0_7 = arith.constant 0 : index
        %12 = vector.load %arg1[%11, %c0_6, %c0_7] : memref<40x8x128xf32, #tpu.memory_space<vmem>>, vector<1x8x128xf32>
        %13 = vector.shape_cast %12 : vector<1x8x128xf32> to vector<8x128xf32>
        %14 = arith.index_cast %arg4 : i32 to index
        %15 = arith.index_cast %arg5 : i32 to index
        %c0_8 = arith.constant 0 : index
        %16 = vector.load %arg2[%14, %15, %c0_8] : memref<4x5x8xf32, #tpu.memory_space<vmem>>, vector<1x1x1xf32>
        %17 = vector.shape_cast %16 : vector<1x1x1xf32> to vector<1x1xf32>
        %18 = vector.broadcast %17 : vector<1x1xf32> to vector<8x128xf32>
        %19 = arith.subf %13, %18 : vector<8x128xf32>
        %20 = math.absf %19 : vector<8x128xf32>
        %21 = arith.subf %arg6, %20 : vector<8x128xf32>
        %c1_i32_9 = arith.constant 1 : i32
        %22 = arith.addi %9, %c1_i32_9 : i32
        %23 = arith.index_cast %22 : i32 to index
        %c0_10 = arith.constant 0 : index
        %c0_11 = arith.constant 0 : index
        %24 = vector.load %arg1[%23, %c0_10, %c0_11] : memref<40x8x128xf32, #tpu.memory_space<vmem>>, vector<1x8x128xf32>
        %25 = vector.shape_cast %24 : vector<1x8x128xf32> to vector<8x128xf32>
        %26 = arith.index_cast %arg4 : i32 to index
        %27 = arith.index_cast %arg5 : i32 to index
        %c1 = arith.constant 1 : index
        %28 = vector.load %arg2[%26, %27, %c1] : memref<4x5x8xf32, #tpu.memory_space<vmem>>, vector<1x1x1xf32>
        %29 = vector.shape_cast %28 : vector<1x1x1xf32> to vector<1x1xf32>
        %30 = vector.broadcast %29 : vector<1x1xf32> to vector<8x128xf32>
        %31 = arith.subf %25, %30 : vector<8x128xf32>
        %32 = math.absf %31 : vector<8x128xf32>
        %33 = arith.subf %21, %32 : vector<8x128xf32>
        %c2_i32 = arith.constant 2 : i32
        %34 = arith.addi %9, %c2_i32 : i32
        %35 = arith.index_cast %34 : i32 to index
        %c0_12 = arith.constant 0 : index
        %c0_13 = arith.constant 0 : index
        %36 = vector.load %arg1[%35, %c0_12, %c0_13] : memref<40x8x128xf32, #tpu.memory_space<vmem>>, vector<1x8x128xf32>
        %37 = vector.shape_cast %36 : vector<1x8x128xf32> to vector<8x128xf32>
        %38 = arith.index_cast %arg4 : i32 to index
        %39 = arith.index_cast %arg5 : i32 to index
        %c2 = arith.constant 2 : index
        %40 = vector.load %arg2[%38, %39, %c2] : memref<4x5x8xf32, #tpu.memory_space<vmem>>, vector<1x1x1xf32>
        %41 = vector.shape_cast %40 : vector<1x1x1xf32> to vector<1x1xf32>
        %42 = vector.broadcast %41 : vector<1x1xf32> to vector<8x128xf32>
        %43 = arith.subf %37, %42 : vector<8x128xf32>
        %44 = math.absf %43 : vector<8x128xf32>
        %45 = arith.subf %33, %44 : vector<8x128xf32>
        %c3_i32 = arith.constant 3 : i32
        %46 = arith.addi %9, %c3_i32 : i32
        %47 = arith.index_cast %46 : i32 to index
        %c0_14 = arith.constant 0 : index
        %c0_15 = arith.constant 0 : index
        %48 = vector.load %arg1[%47, %c0_14, %c0_15] : memref<40x8x128xf32, #tpu.memory_space<vmem>>, vector<1x8x128xf32>
        %49 = vector.shape_cast %48 : vector<1x8x128xf32> to vector<8x128xf32>
        %50 = arith.index_cast %arg4 : i32 to index
        %51 = arith.index_cast %arg5 : i32 to index
        %c3 = arith.constant 3 : index
        %52 = vector.load %arg2[%50, %51, %c3] : memref<4x5x8xf32, #tpu.memory_space<vmem>>, vector<1x1x1xf32>
        %53 = vector.shape_cast %52 : vector<1x1x1xf32> to vector<1x1xf32>
        %54 = vector.broadcast %53 : vector<1x1xf32> to vector<8x128xf32>
        %55 = arith.subf %49, %54 : vector<8x128xf32>
        %56 = math.absf %55 : vector<8x128xf32>
        %57 = arith.subf %45, %56 : vector<8x128xf32>
        %c4_i32_16 = arith.constant 4 : i32
        %58 = arith.addi %9, %c4_i32_16 : i32
        %59 = arith.index_cast %58 : i32 to index
        %c0_17 = arith.constant 0 : index
        %c0_18 = arith.constant 0 : index
        %60 = vector.load %arg1[%59, %c0_17, %c0_18] : memref<40x8x128xf32, #tpu.memory_space<vmem>>, vector<1x8x128xf32>
        %61 = vector.shape_cast %60 : vector<1x8x128xf32> to vector<8x128xf32>
        %62 = arith.index_cast %arg4 : i32 to index
        %63 = arith.index_cast %arg5 : i32 to index
        %c4 = arith.constant 4 : index
        %64 = vector.load %arg2[%62, %63, %c4] : memref<4x5x8xf32, #tpu.memory_space<vmem>>, vector<1x1x1xf32>
        %65 = vector.shape_cast %64 : vector<1x1x1xf32> to vector<1x1xf32>
        %66 = vector.broadcast %65 : vector<1x1xf32> to vector<8x128xf32>
        %67 = arith.subf %61, %66 : vector<8x128xf32>
        %68 = math.absf %67 : vector<8x128xf32>
        %69 = arith.subf %57, %68 : vector<8x128xf32>
        %c5_i32_19 = arith.constant 5 : i32
        %70 = arith.addi %9, %c5_i32_19 : i32
        %71 = arith.index_cast %70 : i32 to index
        %c0_20 = arith.constant 0 : index
        %c0_21 = arith.constant 0 : index
        %72 = vector.load %arg1[%71, %c0_20, %c0_21] : memref<40x8x128xf32, #tpu.memory_space<vmem>>, vector<1x8x128xf32>
        %73 = vector.shape_cast %72 : vector<1x8x128xf32> to vector<8x128xf32>
        %74 = arith.index_cast %arg4 : i32 to index
        %75 = arith.index_cast %arg5 : i32 to index
        %c5 = arith.constant 5 : index
        %76 = vector.load %arg2[%74, %75, %c5] : memref<4x5x8xf32, #tpu.memory_space<vmem>>, vector<1x1x1xf32>
        %77 = vector.shape_cast %76 : vector<1x1x1xf32> to vector<1x1xf32>
        %78 = vector.broadcast %77 : vector<1x1xf32> to vector<8x128xf32>
        %79 = arith.subf %73, %78 : vector<8x128xf32>
        %80 = math.absf %79 : vector<8x128xf32>
        %81 = arith.subf %69, %80 : vector<8x128xf32>
        %c6_i32 = arith.constant 6 : i32
        %82 = arith.addi %9, %c6_i32 : i32
        %83 = arith.index_cast %82 : i32 to index
        %c0_22 = arith.constant 0 : index
        %c0_23 = arith.constant 0 : index
        %84 = vector.load %arg1[%83, %c0_22, %c0_23] : memref<40x8x128xf32, #tpu.memory_space<vmem>>, vector<1x8x128xf32>
        %85 = vector.shape_cast %84 : vector<1x8x128xf32> to vector<8x128xf32>
        %86 = arith.index_cast %arg4 : i32 to index
        %87 = arith.index_cast %arg5 : i32 to index
        %c6 = arith.constant 6 : index
        %88 = vector.load %arg2[%86, %87, %c6] : memref<4x5x8xf32, #tpu.memory_space<vmem>>, vector<1x1x1xf32>
        %89 = vector.shape_cast %88 : vector<1x1x1xf32> to vector<1x1xf32>
        %90 = vector.broadcast %89 : vector<1x1xf32> to vector<8x128xf32>
        %91 = arith.subf %85, %90 : vector<8x128xf32>
        %92 = math.absf %91 : vector<8x128xf32>
        %93 = arith.subf %81, %92 : vector<8x128xf32>
        %c7_i32 = arith.constant 7 : i32
        %94 = arith.addi %9, %c7_i32 : i32
        %95 = arith.index_cast %94 : i32 to index
        %c0_24 = arith.constant 0 : index
        %c0_25 = arith.constant 0 : index
        %96 = vector.load %arg1[%95, %c0_24, %c0_25] : memref<40x8x128xf32, #tpu.memory_space<vmem>>, vector<1x8x128xf32>
        %97 = vector.shape_cast %96 : vector<1x8x128xf32> to vector<8x128xf32>
        %98 = arith.index_cast %arg4 : i32 to index
        %99 = arith.index_cast %arg5 : i32 to index
        %c7 = arith.constant 7 : index
        %100 = vector.load %arg2[%98, %99, %c7] : memref<4x5x8xf32, #tpu.memory_space<vmem>>, vector<1x1x1xf32>
        %101 = vector.shape_cast %100 : vector<1x1x1xf32> to vector<1x1xf32>
        %102 = vector.broadcast %101 : vector<1x1xf32> to vector<8x128xf32>
        %103 = arith.subf %97, %102 : vector<8x128xf32>
        %104 = math.absf %103 : vector<8x128xf32>
        %105 = arith.subf %93, %104 : vector<8x128xf32>
        scf.yield %105 : vector<8x128xf32>
      }
      %c5_i32_3 = arith.constant 5 : i32
      %4 = arith.index_cast %arg4 : i32 to index
      %c0 = arith.constant 0 : index
      %c0_4 = arith.constant 0 : index
      %5 = vector.load %arg3[%4, %c0, %c0_4] : memref<4x8x128xf32, #tpu.memory_space<vmem>>, vector<1x8x128xf32>
      %6 = vector.shape_cast %5 : vector<1x8x128xf32> to vector<8x128xf32>
      %7 = vector.shape_cast %3 : vector<8x128xf32> to vector<1x8x128xf32>
      tpu.vector_store %arg3[%4, %c0, %c0_4], %7 {strides = array<i32>} : memref<4x8x128xf32, #tpu.memory_space<vmem>>, vector<1x8x128xf32>,
    }
    %c4_i32_0 = arith.constant 4 : i32
    return
  }
  func.func @transform_0(%arg0: i32) -> (i32, i32, i32) {
    %c0_i32 = arith.constant 0 : i32
    %c0_i32_0 = arith.constant 0 : i32
    %c0_i32_1 = arith.constant 0 : i32
    return %c0_i32, %c0_i32_0, %arg0 : i32, i32, i32
  }
  func.func @transform_1(%arg0: i32) -> (i32, i32, i32) {
    %c0_i32 = arith.constant 0 : i32
    %c0_i32_0 = arith.constant 0 : i32
    %c0_i32_1 = arith.constant 0 : i32
    %c0_i32_2 = arith.constant 0 : i32
    return %c0_i32, %c0_i32_0, %c0_i32_1 : i32, i32, i32
  }
  func.func @transform_2(%arg0: i32) -> (i32, i32, i32) {
    %c0_i32 = arith.constant 0 : i32
    %c0_i32_0 = arith.constant 0 : i32
    %c0_i32_1 = arith.constant 0 : i32
    return %c0_i32, %c0_i32_0, %arg0 : i32, i32, i32
  }
}

</mosaic_0001>

<llo_original>
// kernel: tpu_custom_call.1
$region0: #{tpu_custom_call.1}
  #allocation0 [shape = 'u32[]', space=smem, size = 0x4, offset = 0x4, fixed_abs, tag = 'smem constant byte address 0x4 - core index']
  #allocation1 [shape = 'u32[144,128]{1,0:T(1,128)}', space=vmem, size = 0x12000, scoped, tag = 'internal scratch']
  %s0 = inlined_call_operand.hbm [shape: f32[40,8,128], index: 0, kind: input, shape index: {}]
  %s1 = inlined_call_operand.vmem [shape: f32[4,5,8], index: 1, kind: input, shape index: {}]
  %s2 = inlined_call_operand.hbm [shape: f32[4,8,128], index: 2, kind: output, shape index: {}]
  %s3 = sld [smem:[#allocation0]]
  $region36: #{tpu_custom_call.1} parent=0
    _
  %s5 = ssub.s32 1, %s3
  %s6 = scalar_select 0, %s5, %s3
  $region1: #{tpu_custom_call.1} parent=0
    #allocation2 [shape = 'u8[163840]{0}', space=vmem, size = 0x28000, scoped, tag = 'input window, operand 0, single buffered']
    #allocation3 [shape = 's32[1]{0}', space=sflag, size = 0x4, scoped, tag = 'scoped memory for tpu_custom_call.1']
    #allocation4 [shape = 's32[1]{0}', space=sflag, size = 0x4, scoped, tag = 'scoped memory for tpu_custom_call.1']
    #allocation5 [shape = 'u8[16384]{0}', space=vmem, size = 0x4000, scoped, tag = 'output window, operand 0, single buffered']
    %7 = vsyncpa [#allocation3], 0
    %8 = vsyncpa [#allocation4], 0
    // Predicated region
    $region2: #{tpu_custom_call.1} parent=1 // pred_check
      _
    $region3: #{tpu_custom_call.1} parent=1 // pred_check_branch
      %10 = sbr.rel (0) target = $region5
    $region4: #{tpu_custom_call.1} parent=1 // pred_region
      %s12 = ssub.s32 5120, 5120
      %13 = vsyncadd [#allocation3], %s12
      %s14 = sshll.u32 [#allocation2], 4
      %s15 = int_to_ptr.vmem [resolvable:$true] %s14
      %20 = dma.hbm_to_vmem [thread:$0]  %s0, 5120, %s15, [#allocation3], 128, 128, 8
    $region5: #{tpu_custom_call.1} parent=1 // pred_fallthru
      _
    // Predicated region
    $region6: #{tpu_custom_call.1} parent=1 // pred_check
      _
    $region7: #{tpu_custom_call.1} parent=1 // pred_check_branch
      %22 = sbr.rel (0) target = $region9
    $region8: #{tpu_custom_call.1} parent=1 // pred_region
      _
    $region9: #{tpu_custom_call.1} parent=1 // pred_fallthru
      _
    // Predicated region
    $region10: #{tpu_custom_call.1} parent=1 // pred_check
      _
    $region11: #{tpu_custom_call.1} parent=1 // pred_check_branch
      %24 = sbr.rel (0) target = $region13
    $region12: #{tpu_custom_call.1} parent=1 // pred_region
      %25 = dma.done [#allocation3], 5120
    $region13: #{tpu_custom_call.1} parent=1 // pred_fallthru
      _
    loop: start=0, step=1, limit=4
    $region14: #{tpu_custom_call.1} parent=1 // loop_pre_header
      _
    $region15: #{tpu_custom_call.1} parent=1 // loop_header
      %s27 = sphi 0, %s31
      %p28 = scmp.ge.s32.totalorder %s27, 4
    $region16: #{tpu_custom_call.1} parent=1 // loop_header_branch
      %30 = sbr.rel (%p28) target = $region20
    $region17: #{tpu_custom_call.1} parent=1 // loop_body
      loop: start=0, step=1, limit=5
      $region21: #{tpu_custom_call.1} parent=17 // loop_pre_header
        _
      $region22: #{tpu_custom_call.1} parent=17 // loop_header
        %s33 = sphi 0, %s37
        %p34 = scmp.ge.s32.totalorder %s33, 5
        %v38 = vphi 0.0, %v137
      $region23: #{tpu_custom_call.1} parent=17 // loop_header_branch
        %36 = sbr.rel (%p34) target = $region27
      $region24: #{tpu_custom_call.1} parent=17 // loop_body
        %s39 = smul.u32 %s33, 8
        %s40 = smul.u32 %s39, 8
        %s41 = scalar_lea.vmem [#allocation2], %s40
        %v42 = vld [vmem:[%s41] sm:$0xff]
        %s43 = smul.u32 %s27, 8
        %s44 = sadd.s32 %s33, %s43
        %s45 = scalar_lea.vmem %s1, %s44
        %v46 = vld [vmem:[%s45] sm:$0x1]
        %s48 = vtos %v46
        %v49 = vstv %s48
        %v51 = vsub.f32 %v42, %v49
        %v52 = vand.u32 2147483647, %v51
        %v53 = vsub.f32 %v38, %v52
        %s54 = sadd.s32 %s39, 1
        %s55 = smul.u32 %s54, 8
        %s56 = scalar_lea.vmem [#allocation2], %s55
        %v57 = vld [vmem:[%s56] sm:$0xff]
        %58 = vrot.lane.b32.xlu0 %v46, 127
        %v59 = vpop.permute.xlu0 %58
        %s60 = vtos %v59
        %v61 = vstv %s60
        %v63 = vsub.f32 %v57, %v61
        %v64 = vand.u32 2147483647, %v63
        %v65 = vsub.f32 %v53, %v64
        %s66 = sadd.s32 %s39, 2
        %s67 = smul.u32 %s66, 8
        %s68 = scalar_lea.vmem [#allocation2], %s67
        %v69 = vld [vmem:[%s68] sm:$0xff]
        %70 = vrot.lane.b32.xlu0 %v46, 126
        %v71 = vpop.permute.xlu0 %70
        %s72 = vtos %v71
        %v73 = vstv %s72
        %v75 = vsub.f32 %v69, %v73
        %v76 = vand.u32 2147483647, %v75
        %v77 = vsub.f32 %v65, %v76
        %s78 = sadd.s32 %s39, 3
        %s79 = smul.u32 %s78, 8
        %s80 = scalar_lea.vmem [#allocation2], %s79
        %v81 = vld [vmem:[%s80] sm:$0xff]
        %82 = vrot.lane.b32.xlu0 %v46, 125
        %v83 = vpop.permute.xlu0 %82
        %s84 = vtos %v83
        %v85 = vstv %s84
        %v87 = vsub.f32 %v81, %v85
        %v88 = vand.u32 2147483647, %v87
        %v89 = vsub.f32 %v77, %v88
        %s90 = sadd.s32 %s39, 4
        %s91 = smul.u32 %s90, 8
        %s92 = scalar_lea.vmem [#allocation2], %s91
        %v93 = vld [vmem:[%s92] sm:$0xff]
        %94 = vrot.lane.b32.xlu0 %v46, 124
        %v95 = vpop.permute.xlu0 %94
        %s96 = vtos %v95
        %v97 = vstv %s96
        %v99 = vsub.f32 %v93, %v97
        %v100 = vand.u32 2147483647, %v99
        %v101 = vsub.f32 %v89, %v100
        %s102 = sadd.s32 %s39, 5
        %s103 = smul.u32 %s102, 8
        %s104 = scalar_lea.vmem [#allocation2], %s103
        %v105 = vld [vmem:[%s104] sm:$0xff]
        %106 = vrot.lane.b32.xlu0 %v46, 123
        %v107 = vpop.permute.xlu0 %106
        %s108 = vtos %v107
        %v109 = vstv %s108
        %v111 = vsub.f32 %v105, %v109
        %v112 = vand.u32 2147483647, %v111
        %v113 = vsub.f32 %v101, %v112
        %s114 = sadd.s32 %s39, 6
        %s115 = smul.u32 %s114, 8
        %s116 = scalar_lea.vmem [#allocation2], %s115
        %v117 = vld [vmem:[%s116] sm:$0xff]
        %118 = vrot.lane.b32.xlu0 %v46, 122
        %v119 = vpop.permute.xlu0 %118
        %s120 = vtos %v119
        %v121 = vstv %s120
        %v123 = vsub.f32 %v117, %v121
        %v124 = vand.u32 2147483647, %v123
        %v125 = vsub.f32 %v113, %v124
        %s126 = sadd.s32 %s39, 7
        %s127 = smul.u32 %s126, 8
        %s128 = scalar_lea.vmem [#allocation2], %s127
        %v129 = vld [vmem:[%s128] sm:$0xff]
        %130 = vrot.lane.b32.xlu0 %v46, 121
        %v131 = vpop.permute.xlu0 %130
        %s132 = vtos %v131
        %v133 = vstv %s132
        %v135 = vsub.f32 %v129, %v133
        %v136 = vand.u32 2147483647, %v135
        %v137 = vsub.f32 %v125, %v136
      $region25: #{tpu_custom_call.1} parent=17 // loop_footer
        %s37 = sadd.s32 1, %s33
      $region26: #{tpu_custom_call.1} parent=17 // loop_footer_branch
        %32 = sbr.rel target = $region22
      $region27: #{tpu_custom_call.1} parent=17 // loop_exit
        _
      %s138 = smul.u32 %s27, 8
      %s139 = scalar_lea.vmem [#allocation5], %s138
      %140 = vst [vmem:[%s139] sm:$0xff] %v38
    $region18: #{tpu_custom_call.1} parent=1 // loop_footer
      %s31 = sadd.s32 1, %s27
    $region19: #{tpu_custom_call.1} parent=1 // loop_footer_branch
      %26 = sbr.rel target = $region15
    $region20: #{tpu_custom_call.1} parent=1 // loop_exit
      _
    // Predicated region
    $region28: #{tpu_custom_call.1} parent=1 // pred_check
      _
    $region29: #{tpu_custom_call.1} parent=1 // pred_check_branch
      %142 = sbr.rel (0) target = $region31
    $region30: #{tpu_custom_call.1} parent=1 // pred_region
      %s144 = ssub.s32 512, 512
      %145 = vsyncadd [#allocation4], %s144
      %s146 = sshll.u32 [#allocation5], 4
      %s147 = int_to_ptr.vmem [resolvable:$true] %s146
      %152 = dma.vmem_to_hbm [thread:$0]  %s147, 512, %s2, [#allocation4], 128, 128, 8
    $region31: #{tpu_custom_call.1} parent=1 // pred_fallthru
      _
    // Predicated region
    $region32: #{tpu_custom_call.1} parent=1 // pred_check
      _
    $region33: #{tpu_custom_call.1} parent=1 // pred_check_branch
      %154 = sbr.rel (0) target = $region35
    $region34: #{tpu_custom_call.1} parent=1 // pred_region
      %155 = dma.done [#allocation4], 512
    $region35: #{tpu_custom_call.1} parent=1 // pred_fallthru
      _
    %156 = vsyncpa [#allocation3], 1
    %157 = vsyncpa [#allocation4], 1

</llo_original>
